<compile_context>
chip_gen: v7x
topology: tpu7x:2x2x1
jax: 0.10.0
libtpu: 0.0.40
codegen_flags: <defaults>
</compile_context>

<pallas_src>
import jax
import jax.numpy as jnp
from jax.experimental import pallas as pl
from jax.experimental.pallas import tpu as pltpu

LANES = 128
SUBLANES = 8
MAX_TILE_ROWS = 2048  # 2048x128 f32 = 1 MiB per input per pipeline buffer


def _round_up(x, m):
    return ((x + m - 1) // m) * m


def _combined_loss_kernel(w_ref, pred_ref, inp_ref, lat_ref, partial_ref):
    """One grid step: weighted SSE of this tile, folded down to one vreg tile.

    w_ref:            SMEM (2,) f32 -> [w_unsup, w_lp]
    pred/inp/lat_ref: VMEM (T, 128) tiles (T multiple of 8)
    partial_ref:      VMEM (8, 128) per-block lane+sublane dense partial
    """
    p = pred_ref[...].astype(jnp.float32)
    d_rec = p - inp_ref[...].astype(jnp.float32)   # predictions - inputs
    d_lp = p - lat_ref[...].astype(jnp.float32)    # predictions - latent
    weighted = w_ref[0] * (d_rec * d_rec) + w_ref[1] * (d_lp * d_lp)
    # Fold (T, 128) -> (8, 128) with pure vreg adds (no cross-lane/XLU work,
    # no masked stores); lanes/sublanes are collapsed once in the epilogue.
    t = weighted.shape[0]
    partial_ref[...] = jnp.sum(
        weighted.reshape(t // SUBLANES, SUBLANES, LANES), axis=0)


def combined_loss(predictions, inputs, latent,
                  unsupervised_loss_weight=1.0, lp_loss_weight=1.0):
    """JAX/Pallas equivalent of CombinedLoss.forward with lp_loss = MSE."""
    assert predictions.shape == inputs.shape == latent.shape
    n_elem = predictions.size

    # Flatten row-major into a lane-dense (rows, 128) slab; pad with zeros so
    # any shape tiles cleanly.
    rows = pl.cdiv(n_elem, LANES)
    tile_rows = min(MAX_TILE_ROWS, _round_up(rows, SUBLANES))
    rows_padded = _round_up(rows, tile_rows)
    padded_elems = rows_padded * LANES
    pad = padded_elems - n_elem

    def _prep(x):
        flat = x.reshape(-1)
        if pad:
            flat = jnp.pad(flat, (0, pad))
        return flat.reshape(rows_padded, LANES)

    p2, i2, l2 = _prep(predictions), _prep(inputs), _prep(latent)
    num_blocks = rows_padded // tile_rows

    weights = jnp.array([unsupervised_loss_weight, lp_loss_weight],
                        dtype=jnp.float32)

    tile_spec = pl.BlockSpec((tile_rows, LANES), lambda i: (i, 0))
    smem_spec = pl.BlockSpec(memory_space=pltpu.MemorySpace.SMEM)

    # Each grid step owns its own (8, 128) output tile; no carried state, so
    # the grid axis is fully parallel (megacore-shardable on v7x).
    partials = pl.pallas_call(
        _combined_loss_kernel,
        out_shape=jax.ShapeDtypeStruct((num_blocks * SUBLANES, LANES),
                                       jnp.float32),
        grid=(num_blocks,),
        in_specs=[smem_spec, tile_spec, tile_spec, tile_spec],
        out_specs=pl.BlockSpec((SUBLANES, LANES), lambda i: (i, 0)),
        compiler_params=pltpu.CompilerParams(
            dimension_semantics=("parallel",)),
    )(weights, p2, i2, l2)

    # Tiny epilogue: collapse the partials and normalize by the TRUE element
    # count (mean reduction of nn.MSELoss).
    return jnp.sum(partials) / jnp.float32(n_elem)
    # TODO(synk): if lp_loss is a generic p-norm instead of MSE, swap the
    # d_lp*d_lp term in the kernel for |d_lp|**p and normalize accordingly.


if __name__ == "__main__":
    key = jax.random.PRNGKey(0)
    k1, k2, k3 = jax.random.split(key, 3)

    shape = (2, 4, 16, 16)  # NCHW -> 2048 elements
    predictions = jax.random.normal(k1, shape, dtype=jnp.float32)
    inputs = jax.random.normal(k2, shape, dtype=jnp.float32)
    latent = jax.random.normal(k3, shape, dtype=jnp.float32)

    w_unsup, w_lp = 1.0, 1.0
    out = combined_loss(predictions, inputs, latent, w_unsup, w_lp)
    out = jax.block_until_ready(out)

    # pure-JAX reference check
    ref = (w_unsup * jnp.mean((predictions - inputs) ** 2)
           + w_lp * jnp.mean((predictions - latent) ** 2))
    assert jnp.allclose(out, ref, rtol=1e-5, atol=1e-5), (out, ref)

    print("KERNEL_OK")
</pallas_src>

<mosaic_0001>
module attributes {stable_mosaic.version = 11 : i64} {
  func.func @_combined_loss_kernel(%arg0: i32, %arg1: memref<2xf32, #tpu.memory_space<smem>>, %arg2: memref<16x128xf32, #tpu.memory_space<vmem>>, %arg3: memref<16x128xf32, #tpu.memory_space<vmem>>, %arg4: memref<16x128xf32, #tpu.memory_space<vmem>>, %arg5: memref<8x128xf32, #tpu.memory_space<vmem>>) attributes {dimension_semantics = [#tpu.dimension_semantics<parallel>], iteration_bounds = array<i64: 1>, scalar_prefetch = 0 : i64, scratch_operands = 0 : i64, tpu.core_type = #tpu.core_type<tc>, window_params = [{transform_indices = @transform_0, window_bounds = array<i64: 2>}, {transform_indices = @transform_1, window_bounds = array<i64: 16, 128>}, {transform_indices = @transform_2, window_bounds = array<i64: 16, 128>}, {transform_indices = @transform_3, window_bounds = array<i64: 16, 128>}, {transform_indices = @transform_4, window_bounds = array<i64: 8, 128>}]} {
    %c0 = arith.constant 0 : index
    %c0_0 = arith.constant 0 : index
    %0 = vector.load %arg2[%c0, %c0_0] : memref<16x128xf32, #tpu.memory_space<vmem>>, vector<16x128xf32>
    %c0_1 = arith.constant 0 : index
    %c0_2 = arith.constant 0 : index
    %1 = vector.load %arg3[%c0_1, %c0_2] : memref<16x128xf32, #tpu.memory_space<vmem>>, vector<16x128xf32>
    %2 = arith.subf %0, %1 : vector<16x128xf32>
    %c0_3 = arith.constant 0 : index
    %c0_4 = arith.constant 0 : index
    %3 = vector.load %arg4[%c0_3, %c0_4] : memref<16x128xf32, #tpu.memory_space<vmem>>, vector<16x128xf32>
    %4 = arith.subf %0, %3 : vector<16x128xf32>
    %c0_5 = arith.constant 0 : index
    %5 = memref.load %arg1[%c0_5] : memref<2xf32, #tpu.memory_space<smem>>
    %6 = arith.mulf %2, %2 : vector<16x128xf32>
    %7 = vector.broadcast %5 : f32 to vector<16x128xf32>
    %8 = arith.mulf %7, %6 : vector<16x128xf32>
    %c1 = arith.constant 1 : index
    %9 = memref.load %arg1[%c1] : memref<2xf32, #tpu.memory_space<smem>>
    %10 = arith.mulf %4, %4 : vector<16x128xf32>
    %11 = vector.broadcast %9 : f32 to vector<16x128xf32>
    %12 = arith.mulf %11, %10 : vector<16x128xf32>
    %13 = arith.addf %8, %12 : vector<16x128xf32>
    %14 = vector.shape_cast %13 : vector<16x128xf32> to vector<2x8x128xf32>
    %cst = arith.constant dense<0.000000e+00> : vector<8x128xf32>
    %15 = vector.multi_reduction <add>, %14, %cst [0] : vector<2x8x128xf32> to vector<8x128xf32>
    %c0_6 = arith.constant 0 : index
    %c0_7 = arith.constant 0 : index
    %16 = vector.load %arg5[%c0_6, %c0_7] : memref<8x128xf32, #tpu.memory_space<vmem>>, vector<8x128xf32>
    tpu.vector_store %arg5[%c0_6, %c0_7], %15 {strides = array<i32>} : memref<8x128xf32, #tpu.memory_space<vmem>>, vector<8x128xf32>,
    return
  }
  func.func @transform_0(%arg0: i32) -> i32 {
    %c0_i32 = arith.constant 0 : i32
    %c0_i32_0 = arith.constant 0 : i32
    return %c0_i32 : i32
  }
  func.func @transform_1(%arg0: i32) -> (i32, i32) {
    %c0_i32 = arith.constant 0 : i32
    %c0_i32_0 = arith.constant 0 : i32
    return %arg0, %c0_i32 : i32, i32
  }
  func.func @transform_2(%arg0: i32) -> (i32, i32) {
    %c0_i32 = arith.constant 0 : i32
    %c0_i32_0 = arith.constant 0 : i32
    return %arg0, %c0_i32 : i32, i32
  }
  func.func @transform_3(%arg0: i32) -> (i32, i32) {
    %c0_i32 = arith.constant 0 : i32
    %c0_i32_0 = arith.constant 0 : i32
    return %arg0, %c0_i32 : i32, i32
  }
  func.func @transform_4(%arg0: i32) -> (i32, i32) {
    %c0_i32 = arith.constant 0 : i32
    %c0_i32_0 = arith.constant 0 : i32
    return %arg0, %c0_i32 : i32, i32
  }
}

</mosaic_0001>

<llo_original>
// kernel: tpu_custom_call.1
$region0: #{tpu_custom_call.1}
  #allocation0 [shape = 'u32[]', space=smem, size = 0x4, offset = 0x4, fixed_abs, tag = 'smem constant byte address 0x4 - core index']
  #allocation1 [shape = 'u32[144,128]{1,0:T(1,128)}', space=vmem, size = 0x12000, scoped, tag = 'internal scratch']
  %s0 = inlined_call_operand.hbm [shape: f32[2], index: 0, kind: input, shape index: {}]
  %s1 = inlined_call_operand.hbm [shape: f32[16,128], index: 1, kind: input, shape index: {}]
  %s2 = inlined_call_operand.hbm [shape: f32[16,128], index: 2, kind: input, shape index: {}]
  %s3 = inlined_call_operand.hbm [shape: f32[16,128], index: 3, kind: input, shape index: {}]
  %s4 = inlined_call_operand.hbm [shape: f32[8,128], index: 4, kind: output, shape index: {}]
  %s5 = sld [smem:[#allocation0]]
  $region42: #{tpu_custom_call.1} parent=0
    _
  %s7 = ssub.s32 1, %s5
  %s8 = scalar_select 0, %s7, %s5
  $region1: #{tpu_custom_call.1} parent=0
    #allocation2 [shape = 'u8[512]{0}', space=smem, size = 0x200, scoped, tag = 'input window, operand 0, single buffered']
    #allocation3 [shape = 's32[1]{0}', space=sflag, size = 0x4, scoped, tag = 'scoped memory for tpu_custom_call.1']
    #allocation4 [shape = 's32[1]{0}', space=sflag, size = 0x4, scoped, tag = 'scoped memory for tpu_custom_call.1']
    #allocation5 [shape = 's32[1]{0}', space=sflag, size = 0x4, scoped, tag = 'scoped memory for tpu_custom_call.1']
    #allocation6 [shape = 'u8[8192]{0}', space=vmem, size = 0x2000, scoped, tag = 'input window, operand 1, single buffered']
    #allocation7 [shape = 'u8[8192]{0}', space=vmem, size = 0x2000, scoped, tag = 'input window, operand 2, single buffered']
    #allocation8 [shape = 's32[1]{0}', space=sflag, size = 0x4, scoped, tag = 'scoped memory for tpu_custom_call.1']
    #allocation9 [shape = 'u8[8192]{0}', space=vmem, size = 0x2000, scoped, tag = 'input window, operand 3, single buffered']
    #allocation10 [shape = 'u8[4096]{0}', space=vmem, size = 0x1000, scoped, tag = 'output window, operand 0, single buffered']
    %9 = vsyncpa [#allocation5], 0
    %10 = vsyncpa [#allocation3], 0
    %11 = vsyncpa [#allocation8], 0
    %12 = vsyncpa [#allocation4], 0
    // Predicated region
    $region2: #{tpu_custom_call.1} parent=1 // pred_check
      _
    $region3: #{tpu_custom_call.1} parent=1 // pred_check_branch
      %14 = sbr.rel (0) target = $region5
    $region4: #{tpu_custom_call.1} parent=1 // pred_region
      %s16 = ssub.s32 16, 16
      %17 = vsyncadd [#allocation5], %s16
      %20 = dma.hbm_to_smem %s0, 16, [#allocation2], [#allocation5]
    $region5: #{tpu_custom_call.1} parent=1 // pred_fallthru
      _
    // Predicated region
    $region6: #{tpu_custom_call.1} parent=1 // pred_check
      _
    $region7: #{tpu_custom_call.1} parent=1 // pred_check_branch
      %22 = sbr.rel (0) target = $region9
    $region8: #{tpu_custom_call.1} parent=1 // pred_region
      %s24 = ssub.s32 256, 256
      %25 = vsyncadd [#allocation3], %s24
      %s26 = sshll.u32 [#allocation6], 4
      %s27 = int_to_ptr.vmem [resolvable:$true] %s26
      %32 = dma.hbm_to_vmem [thread:$0]  %s1, 256, %s27, [#allocation3], 128, 128, 8
    $region9: #{tpu_custom_call.1} parent=1 // pred_fallthru
      _
    // Predicated region
    $region10: #{tpu_custom_call.1} parent=1 // pred_check
      _
    $region11: #{tpu_custom_call.1} parent=1 // pred_check_branch
      %34 = sbr.rel (0) target = $region13
    $region12: #{tpu_custom_call.1} parent=1 // pred_region
      %s36 = ssub.s32 256, 256
      %37 = vsyncadd [#allocation8], %s36
      %s38 = sshll.u32 [#allocation7], 4
      %s39 = int_to_ptr.vmem [resolvable:$true] %s38
      %44 = dma.hbm_to_vmem [thread:$0]  %s2, 256, %s39, [#allocation8], 128, 128, 8
    $region13: #{tpu_custom_call.1} parent=1 // pred_fallthru
      _
    // Predicated region
    $region14: #{tpu_custom_call.1} parent=1 // pred_check
      _
    $region15: #{tpu_custom_call.1} parent=1 // pred_check_branch
      %46 = sbr.rel (0) target = $region17
    $region16: #{tpu_custom_call.1} parent=1 // pred_region
      %s48 = ssub.s32 256, 256
      %49 = vsyncadd [#allocation8], %s48
      %s50 = sshll.u32 [#allocation9], 4
      %s51 = int_to_ptr.vmem [resolvable:$true] %s50
      %56 = dma.hbm_to_vmem [thread:$0]  %s3, 256, %s51, [#allocation8], 128, 128, 8
    $region17: #{tpu_custom_call.1} parent=1 // pred_fallthru
      _
    // Predicated region
    $region18: #{tpu_custom_call.1} parent=1 // pred_check
      _
    $region19: #{tpu_custom_call.1} parent=1 // pred_check_branch
      %58 = sbr.rel (0) target = $region21
    $region20: #{tpu_custom_call.1} parent=1 // pred_region
      %59 = dma.done [#allocation5], 16
    $region21: #{tpu_custom_call.1} parent=1 // pred_fallthru
      _
    // Predicated region
    $region22: #{tpu_custom_call.1} parent=1 // pred_check
      _
    $region23: #{tpu_custom_call.1} parent=1 // pred_check_branch
      %61 = sbr.rel (0) target = $region25
    $region24: #{tpu_custom_call.1} parent=1 // pred_region
      %62 = dma.done [#allocation3], 256
    $region25: #{tpu_custom_call.1} parent=1 // pred_fallthru
      _
    // Predicated region
    $region26: #{tpu_custom_call.1} parent=1 // pred_check
      _
    $region27: #{tpu_custom_call.1} parent=1 // pred_check_branch
      %64 = sbr.rel (0) target = $region29
    $region28: #{tpu_custom_call.1} parent=1 // pred_region
      %65 = dma.done [#allocation8], 256
    $region29: #{tpu_custom_call.1} parent=1 // pred_fallthru
      _
    // Predicated region
    $region30: #{tpu_custom_call.1} parent=1 // pred_check
      _
    $region31: #{tpu_custom_call.1} parent=1 // pred_check_branch
      %67 = sbr.rel (0) target = $region33
    $region32: #{tpu_custom_call.1} parent=1 // pred_region
      %68 = dma.done [#allocation8], 256
    $region33: #{tpu_custom_call.1} parent=1 // pred_fallthru
      _
    %69 = sfence
    %v70 = vld [vmem:[#allocation6] sm:$0xff]
    %v71 = vld [vmem:[#allocation6 + $0x8] sm:$0xff]
    %v72 = vld [vmem:[#allocation7] sm:$0xff]
    %v73 = vld [vmem:[#allocation7 + $0x8] sm:$0xff]
    %v74 = vsub.f32 %v70, %v72
    %v75 = vsub.f32 %v71, %v73
    %v76 = vld [vmem:[#allocation9] sm:$0xff]
    %v77 = vld [vmem:[#allocation9 + $0x8] sm:$0xff]
    %v78 = vsub.f32 %v70, %v76
    %v79 = vsub.f32 %v71, %v77
    %s80 = sld [smem:[#allocation2]]
    %v81 = vmul.f32 %v74, %v74
    %v82 = vmul.f32 %v75, %v75
    %v83 = vstv %s80
    %v84 = vmul.f32 %v83, %v81
    %v85 = vmul.f32 %v83, %v82
    %s86 = sld [smem:[#allocation2 + $0x1]]
    %v87 = vmul.f32 %v78, %v78
    %v88 = vmul.f32 %v79, %v79
    %v89 = vstv %s86
    %v90 = vmul.f32 %v89, %v87
    %v91 = vmul.f32 %v89, %v88
    %v92 = vadd.f32 %v84, %v90
    %v93 = vadd.f32 %v85, %v91
    %v94 = vadd.f32 %v92, %v93
    %95 = vst [vmem:[#allocation10] sm:$0xff] %v94
    // Predicated region
    $region34: #{tpu_custom_call.1} parent=1 // pred_check
      _
    $region35: #{tpu_custom_call.1} parent=1 // pred_check_branch
      %97 = sbr.rel (0) target = $region37
    $region36: #{tpu_custom_call.1} parent=1 // pred_region
      %s99 = ssub.s32 128, 128
      %100 = vsyncadd [#allocation4], %s99
      %s102 = sshll.u32 [#allocation10], 4
      %s103 = int_to_ptr.vmem [resolvable:$true] %s102
      %105 = dma.vmem_to_hbm [thread:$0]  %s103, 128, %s4, [#allocation4]
    $region37: #{tpu_custom_call.1} parent=1 // pred_fallthru
      _
    // Predicated region
    $region38: #{tpu_custom_call.1} parent=1 // pred_check
      _
    $region39: #{tpu_custom_call.1} parent=1 // pred_check_branch
      %107 = sbr.rel (0) target = $region41
    $region40: #{tpu_custom_call.1} parent=1 // pred_region
      %108 = dma.done [#allocation4], 128
    $region41: #{tpu_custom_call.1} parent=1 // pred_fallthru
      _
    %109 = vsyncpa [#allocation3], 1
    %110 = vsyncpa [#allocation8], 1
    %111 = vsyncpa [#allocation4], 1
    %112 = vsyncpa [#allocation5], 1

</llo_original>
